<compile_context>
chip_gen: v7x
topology: tpu7x:2x2x1
jax: 0.10.0
libtpu: 0.0.40
codegen_flags: <defaults>
</compile_context>

<pallas_src>
import functools
from typing import NamedTuple

import jax
import jax.numpy as jnp
from jax import lax
from jax.experimental import pallas as pl
from jax.experimental.pallas import tpu as pltpu


# ---------------------------------------------------------------------------
# Kernels
# ---------------------------------------------------------------------------

def _linear_kernel(x_ref, w_ref, b_ref, o_ref):
    # y = x @ W  (W already stored as (F3, n_out)) + b ; f32 accumulation.
    y = lax.dot_general(
        x_ref[...], w_ref[...],
        dimension_numbers=(((1,), (0,)), ((), ())),
        preferred_element_type=jnp.float32,
    )
    o_ref[...] = (y + b_ref[...]).astype(o_ref.dtype)


def _dropout_linear_kernel(x_ref, m_ref, w_ref, b_ref, o_ref, *, inv_keep):
    # Inverted dropout fused with the Linear: mask is {0,1} in the stream
    # dtype (exact), 1/(1-p) scale applied to the small (TM, n_out) result.
    x = x_ref[...] * m_ref[...]
    y = lax.dot_general(
        x, w_ref[...],
        dimension_numbers=(((1,), (0,)), ((), ())),
        preferred_element_type=jnp.float32,
    )
    o_ref[...] = (y * jnp.float32(inv_keep) + b_ref[...]).astype(o_ref.dtype)


# ---------------------------------------------------------------------------
# Parameter preparation (hoisted; do this once for static weights)
# ---------------------------------------------------------------------------

class ClassifierParams(NamedTuple):
    w_t: jax.Array        # (F3, n_out)  stream dtype, possibly lane-padded
    b_row: jax.Array      # (1, n_out)   float32
    n_classes: int        # true number of classes (n_out >= n_classes)


def prepare_classifier_params(weight, bias, *, stream_dtype=jnp.bfloat16):
    """Convert PyTorch nn.Linear params (n_classes, F3)/(n_classes,) to the
    kernel layout, once.  Pads the class axis to a multiple of 128 only when
    F3 is large enough that x traffic dominates masked output stores."""
    weight = jnp.asarray(weight)
    bias = jnp.asarray(bias)
    n_classes, F3 = weight.shape

    pad_out = (F3 > 256) and (n_classes % 128 != 0)
    n_out = ((n_classes + 127) // 128) * 128 if pad_out else n_classes

    w_t = weight.T.astype(stream_dtype)                      # (F3, n_classes)
    b_row = bias.astype(jnp.float32).reshape(1, n_classes)   # (1, n_classes)
    if n_out != n_classes:
        w_t = jnp.zeros((F3, n_out), stream_dtype).at[:, :n_classes].set(w_t)
        b_row = jnp.zeros((1, n_out), jnp.float32).at[:, :n_classes].set(b_row)
    return ClassifierParams(w_t=w_t, b_row=b_row, n_classes=n_classes)


# ---------------------------------------------------------------------------
# Tiling selection (VMEM-budget derived, >=2 tiles for the v7x megacore)
# ---------------------------------------------------------------------------

_VMEM_TILE_BUDGET = 24 * 1024 * 1024   # conservative: fits every generation
_VMEM_LIMIT_BYTES = 32 * 1024 * 1024   # explicit scoped limit (<= v7x 64 MiB)
_TM_CAP = 512                          # ~85% of HBM roofline at 512-row tiles


def _round_up(n, m):
    return ((n + m - 1) // m) * m


def _choose_tiling(B, F3, n_out, stream_bytes, n_streamed):
    """Pick (TM, grid) so double-buffered streamed inputs + resident W/bias +
    output buffers fit the VMEM budget, tiles are balanced, and there are at
    least two tiles (both v7x TensorCores get work) whenever B allows it."""
    per_row = 2 * n_streamed * F3 * stream_bytes + 2 * n_out * 4
    fixed = 2 * F3 * n_out * stream_bytes + 2 * max(n_out, 128) * 4
    tm_cap = max(8, (_VMEM_TILE_BUDGET - fixed) // per_row)
    tm_cap = min(tm_cap, _TM_CAP)
    tm_cap = (tm_cap // 8) * 8

    if B < 16:  # block == full array dim is legal even if B % 8 != 0
        return B, 1

    min_tiles = 2                                   # v7x: 2 TCs per chip
    num_tiles = max(min_tiles, pl.cdiv(B, tm_cap))  # balanced, not 512+ragged
    tm = min(tm_cap, _round_up(pl.cdiv(B, num_tiles), 8))
    return tm, pl.cdiv(B, tm)


# ---------------------------------------------------------------------------
# Forward pass
# ---------------------------------------------------------------------------

def eeg_classifier_forward(x, params: ClassifierParams, *, drop_prob=0.5,
                           training=False, rng_key=None,
                           min_pallas_batch=128):
    """EEGClassifier forward: Dropout(p) -> Linear(F3, n_classes).

    Args:
      x:      (B, F3) float array.
      params: from prepare_classifier_params (hoisted, reusable).
    Returns:
      (B, n_classes) float32.
    """
    if not (0.0 <= drop_prob < 1.0):
        raise ValueError("drop_prob must be in [0, 1).")
    B, F3 = x.shape
    F3_w, n_out = params.w_t.shape
    assert F3 == F3_w, (F3, F3_w)

    stream_dtype = params.w_t.dtype
    stream_bytes = jnp.dtype(stream_dtype).itemsize
    x_s = x.astype(stream_dtype)

    use_dropout = bool(training) and drop_prob > 0.0
    if use_dropout:
        if rng_key is None:
            rng_key = jax.random.PRNGKey(0)
        keep = jax.random.bernoulli(rng_key, 1.0 - drop_prob, (B, F3))
        mask = keep.astype(stream_dtype)           # exact {0, 1}
        inv_keep = 1.0 / (1.0 - drop_prob)

    # --- Tiny-batch fallback: pallas_call overhead dominates; let XLA fuse it.
    if B < min_pallas_batch:
        xx = x_s * mask if use_dropout else x_s
        y = jnp.dot(xx, params.w_t, preferred_element_type=jnp.float32)
        if use_dropout:
            y = y * jnp.float32(inv_keep)
        out = y + params.b_row
    else:
        # --- Pallas path.
        n_streamed = 2 if use_dropout else 1
        TM, grid_m = _choose_tiling(B, F3, n_out, stream_bytes, n_streamed)

        x_spec = pl.BlockSpec((TM, F3), lambda i: (i, 0))
        m_spec = pl.BlockSpec((TM, F3), lambda i: (i, 0))
        w_spec = pl.BlockSpec((F3, n_out), lambda i: (0, 0))   # VMEM-resident
        b_spec = pl.BlockSpec((1, n_out), lambda i: (0, 0))    # VMEM-resident
        o_spec = pl.BlockSpec((TM, n_out), lambda i: (i, 0))

        bytes_accessed = (n_streamed * B * F3 * stream_bytes
                          + F3 * n_out * stream_bytes
                          + n_out * 4
                          + B * n_out * 4)
        cost = pl.CostEstimate(flops=2 * B * F3 * n_out,
                               transcendentals=0,
                               bytes_accessed=bytes_accessed)
        cparams = pltpu.CompilerParams(
            dimension_semantics=("parallel",),
            vmem_limit_bytes=_VMEM_LIMIT_BYTES,
        )
        out_shape = jax.ShapeDtypeStruct((B, n_out), jnp.float32)

        if not use_dropout:
            out = pl.pallas_call(
                _linear_kernel,
                out_shape=out_shape,
                grid=(grid_m,),
                in_specs=[x_spec, w_spec, b_spec],
                out_specs=o_spec,
                compiler_params=cparams,
                cost_estimate=cost,
            )(x_s, params.w_t, params.b_row)
        else:
            kernel = functools.partial(_dropout_linear_kernel,
                                       inv_keep=inv_keep)
            out = pl.pallas_call(
                kernel,
                out_shape=out_shape,
                grid=(grid_m,),
                in_specs=[x_spec, m_spec, w_spec, b_spec],
                out_specs=o_spec,
                compiler_params=cparams,
                cost_estimate=cost,
            )(x_s, mask, params.w_t, params.b_row)

    if n_out != params.n_classes:   # only when F3 > 256 forced lane padding
        out = out[:, :params.n_classes]
    return out


# ---------------------------------------------------------------------------
# Demo / self-check
# ---------------------------------------------------------------------------

def _init_linear_params(key, F3, n_classes):
    # Deterministic init mimicking nn.Linear: U(-1/sqrt(F3), 1/sqrt(F3)).
    kw, kb = jax.random.split(key)
    bound = 1.0 / jnp.sqrt(jnp.float32(F3))
    weight = jax.random.uniform(kw, (n_classes, F3), jnp.float32,
                                minval=-bound, maxval=bound)
    bias = jax.random.uniform(kb, (n_classes,), jnp.float32,
                              minval=-bound, maxval=bound)
    return weight, bias


if __name__ == "__main__":
    key = jax.random.PRNGKey(0)
    k_x, k_p, k_d = jax.random.split(key, 3)

    B = 256        # large enough to exercise the multi-tile Pallas path
    F3 = 32        # feature dim
    n_classes = 8  # number of classes

    x = jax.random.normal(k_x, (B, F3), jnp.float32)
    weight, bias = _init_linear_params(k_p, F3, n_classes)

    # Hoisted, one-time weight preparation (bf16 streaming layout).
    params = prepare_classifier_params(weight, bias)

    ref = x @ weight.T + bias  # float32 reference

    # Eval mode (dropout = identity): Pallas path, grid of 2 batch tiles.
    out = eeg_classifier_forward(x, params, training=False)
    out = jax.block_until_ready(out)
    assert out.shape == (B, n_classes)
    # bf16-streamed inputs with f32 accumulation -> bf16-level tolerance.
    assert jnp.allclose(out, ref, atol=3e-2, rtol=3e-2), \
        float(jnp.max(jnp.abs(out - ref)))

    # Training with p=0 must equal the eval Linear exactly.
    out_p0 = eeg_classifier_forward(x, params, drop_prob=0.0, training=True,
                                    rng_key=k_d)
    out_p0 = jax.block_until_ready(out_p0)
    assert jnp.allclose(out_p0, out, atol=1e-6, rtol=1e-6)

    # Training with p=0.5: dropout mask fused into the kernel.
    out_tr = eeg_classifier_forward(x, params, drop_prob=0.5, training=True,
                                    rng_key=k_d)
    out_tr = jax.block_until_ready(out_tr)
    assert out_tr.shape == (B, n_classes)
    assert bool(jnp.all(jnp.isfinite(out_tr)))

    # Tiny-batch dispatch (B=2 < 128): fused XLA fallback, same semantics.
    out_small = eeg_classifier_forward(x[:2], params, training=False)
    out_small = jax.block_until_ready(out_small)
    assert out_small.shape == (2, n_classes)
    assert jnp.allclose(out_small, ref[:2], atol=3e-2, rtol=3e-2)

    print("KERNEL_OK")
</pallas_src>

<mosaic_0001>
module attributes {stable_mosaic.version = 11 : i64} {
  func.func @_linear_kernel(%arg0: i32, %arg1: memref<128x32xbf16, #tpu.memory_space<vmem>>, %arg2: memref<32x8xbf16, #tpu.memory_space<vmem>>, %arg3: memref<1x8xf32, #tpu.memory_space<vmem>>, %arg4: memref<128x8xf32, #tpu.memory_space<vmem>>) attributes {dimension_semantics = [#tpu.dimension_semantics<parallel>], iteration_bounds = array<i64: 2>, scalar_prefetch = 0 : i64, scratch_operands = 0 : i64, tpu.core_type = #tpu.core_type<tc>, window_params = [{transform_indices = @transform_0, window_bounds = array<i64: 128, 32>}, {pipeline_mode = #tpu.pipeline_mode<synchronous>, transform_indices = @transform_1, window_bounds = array<i64: 32, 8>}, {pipeline_mode = #tpu.pipeline_mode<synchronous>, transform_indices = @transform_2, window_bounds = array<i64: 1, 8>}, {transform_indices = @transform_3, window_bounds = array<i64: 128, 8>}]} {
    %c0 = arith.constant 0 : index
    %c0_0 = arith.constant 0 : index
    %0 = vector.load %arg1[%c0, %c0_0] : memref<128x32xbf16, #tpu.memory_space<vmem>>, vector<128x32xbf16>
    %c0_1 = arith.constant 0 : index
    %c0_2 = arith.constant 0 : index
    %1 = vector.load %arg2[%c0_1, %c0_2] : memref<32x8xbf16, #tpu.memory_space<vmem>>, vector<32x8xbf16>
    %cst = arith.constant dense<0.000000e+00> : vector<128x8xf32>
    %2 = tpu.matmul %0, %1, %cst {dimension_numbers = #tpu.dot_dimension_numbers<[1], [0], [0], [1], [0, 0, 1, 1], [], []>} : vector<128x32xbf16>, vector<32x8xbf16>, vector<128x8xf32> -> vector<128x8xf32>
    %c0_3 = arith.constant 0 : index
    %c0_4 = arith.constant 0 : index
    %3 = vector.load %arg3[%c0_3, %c0_4] : memref<1x8xf32, #tpu.memory_space<vmem>>, vector<1x8xf32>
    %4 = vector.broadcast %3 : vector<1x8xf32> to vector<128x8xf32>
    %5 = arith.addf %2, %4 : vector<128x8xf32>
    %c0_5 = arith.constant 0 : index
    %c0_6 = arith.constant 0 : index
    %6 = vector.load %arg4[%c0_5, %c0_6] : memref<128x8xf32, #tpu.memory_space<vmem>>, vector<128x8xf32>
    tpu.vector_store %arg4[%c0_5, %c0_6], %5 {strides = array<i32>} : memref<128x8xf32, #tpu.memory_space<vmem>>, vector<128x8xf32>,
    return
  }
  func.func @transform_0(%arg0: i32) -> (i32, i32) {
    %c0_i32 = arith.constant 0 : i32
    %c0_i32_0 = arith.constant 0 : i32
    return %arg0, %c0_i32 : i32, i32
  }
  func.func @transform_1(%arg0: i32) -> (i32, i32) {
    %c0_i32 = arith.constant 0 : i32
    %c0_i32_0 = arith.constant 0 : i32
    %c0_i32_1 = arith.constant 0 : i32
    return %c0_i32, %c0_i32_0 : i32, i32
  }
  func.func @transform_2(%arg0: i32) -> (i32, i32) {
    %c0_i32 = arith.constant 0 : i32
    %c0_i32_0 = arith.constant 0 : i32
    %c0_i32_1 = arith.constant 0 : i32
    return %c0_i32, %c0_i32_0 : i32, i32
  }
  func.func @transform_3(%arg0: i32) -> (i32, i32) {
    %c0_i32 = arith.constant 0 : i32
    %c0_i32_0 = arith.constant 0 : i32
    return %arg0, %c0_i32 : i32, i32
  }
}

</mosaic_0001>

<llo_original>
// kernel: tpu_custom_call.1
$region0: #{tpu_custom_call.1}
  #allocation0 [shape = 'u32[]', space=smem, size = 0x4, offset = 0x4, fixed_abs, tag = 'smem constant byte address 0x4 - core index']
  #allocation1 [shape = 'u32[144,128]{1,0:T(1,128)}', space=vmem, size = 0x12000, scoped, tag = 'internal scratch']
  %s0 = inlined_call_operand.vmem [shape: bf16[256,32], index: 0, kind: input, shape index: {}]
  %s1 = inlined_call_operand.vmem [shape: bf16[32,8], index: 1, kind: input, shape index: {}]
  %s2 = inlined_call_operand.vmem [shape: f32[1,8], index: 2, kind: input, shape index: {}]
  %s3 = inlined_call_operand.vmem [shape: f32[256,8], index: 3, kind: output, shape index: {}]
  %s4 = sld [smem:[#allocation0]]
  $region45: #{tpu_custom_call.1} parent=0
    _
  %s6 = ssub.s32 1, %s4
  %s7 = scalar_select 0, %s6, %s4
  loop: start=0, step=1, limit=4
  $region2: #{tpu_custom_call.1} parent=0 // loop_pre_header
    _
  $region3: #{tpu_custom_call.1} parent=0 // loop_header
    %s9 = sphi 0, %s13
    %p10 = scmp.ge.s32.totalorder %s9, 4
    %s19 = sphi 0, %s21
    %s22 = sphi 0, %s19
    %s23 = sphi 0, %s22
    %s39 = sphi 0, %s23
    %s43 = sphi 0, %s43
    %s45 = sphi 0, %s43
    %s46 = sphi 0, %s45
    %s60 = sphi 0, %s46
    %s64 = sphi 0, %s64
    %s66 = sphi 0, %s64
    %s67 = sphi 0, %s66
    %s81 = sphi 0, %s67
    %s87 = sphi 0, %s89
    %s90 = sphi 0, %s87
    %s91 = sphi 0, %s90
    %s107 = sphi 0, %s91
  $region4: #{tpu_custom_call.1} parent=0 // loop_header_branch
    %12 = sbr.rel (%p10) target = $region8
  $region5: #{tpu_custom_call.1} parent=0 // loop_body
    %s14 = ssub.s32 %s9, 1
    %s15 = ssub.s32 %s9, 2
    %s16 = sadd.s32 %s9, 1
    %s17 = ssub.s32 %s9, %s16
    %p18 = scmp.eq.s32.totalorder %s17, 0
    %s20 = sadd.s32 %s19, 1
    %s21 = scalar_select %p18, %s19, %s20
    %p24 = pneg %p18
    %p25 = scmp.eq.s32.totalorder %s9, 1
    %p26 = por %p24, %p25
    %p27 = scmp.ne.s32.totalorder %s19, %s22
    %p28 = scmp.eq.s32.totalorder %s9, 0
    %p29 = por %p27, %p28
    %p30 = scmp.ne.s32.totalorder %s19, %s22
    %p31 = scmp.eq.s32.totalorder %s14, 1
    %p32 = por %p30, %p31
    %p33 = scmp.ne.s32.totalorder %s22, %s23
    %p34 = scmp.eq.s32.totalorder %s14, 0
    %p35 = por %p33, %p34
    %p36 = scmp.ne.s32.totalorder %s22, %s23
    %p37 = scmp.eq.s32.totalorder %s15, 1
    %p38 = por %p36, %p37
    %p40 = scmp.ne.s32.totalorder %s23, %s39
    %p41 = scmp.eq.s32.totalorder %s15, 0
    %p42 = por %p40, %p41
    %s44 = sadd.s32 %s43, 1
    %p47 = scmp.eq.s32.totalorder %s9, 1
    %p48 = scmp.ne.s32.totalorder %s43, %s45
    %p49 = scmp.eq.s32.totalorder %s9, 0
    %p50 = por %p48, %p49
    %p51 = scmp.ne.s32.totalorder %s43, %s45
    %p52 = scmp.eq.s32.totalorder %s14, 1
    %p53 = por %p51, %p52
    %p54 = scmp.ne.s32.totalorder %s45, %s46
    %p55 = scmp.eq.s32.totalorder %s14, 0
    %p56 = por %p54, %p55
    %p57 = scmp.ne.s32.totalorder %s45, %s46
    %p58 = scmp.eq.s32.totalorder %s15, 1
    %p59 = por %p57, %p58
    %p61 = scmp.ne.s32.totalorder %s46, %s60
    %p62 = scmp.eq.s32.totalorder %s15, 0
    %p63 = por %p61, %p62
    %s65 = sadd.s32 %s64, 1
    %p68 = scmp.eq.s32.totalorder %s9, 1
    %p69 = scmp.ne.s32.totalorder %s64, %s66
    %p70 = scmp.eq.s32.totalorder %s9, 0
    %p71 = por %p69, %p70
    %p72 = scmp.ne.s32.totalorder %s64, %s66
    %p73 = scmp.eq.s32.totalorder %s14, 1
    %p74 = por %p72, %p73
    %p75 = scmp.ne.s32.totalorder %s66, %s67
    %p76 = scmp.eq.s32.totalorder %s14, 0
    %p77 = por %p75, %p76
    %p78 = scmp.ne.s32.totalorder %s66, %s67
    %p79 = scmp.eq.s32.totalorder %s15, 1
    %p80 = por %p78, %p79
    %p82 = scmp.ne.s32.totalorder %s67, %s81
    %p83 = scmp.eq.s32.totalorder %s15, 0
    %p84 = por %p82, %p83
    %s85 = ssub.s32 %s9, %s16
    %p86 = scmp.eq.s32.totalorder %s85, 0
    %s88 = sadd.s32 %s87, 1
    %s89 = scalar_select %p86, %s87, %s88
    %p92 = pneg %p86
    %p93 = scmp.eq.s32.totalorder %s9, 1
    %p94 = por %p92, %p93
    %p95 = scmp.ne.s32.totalorder %s87, %s90
    %p96 = scmp.eq.s32.totalorder %s9, 0
    %p97 = por %p95, %p96
    %p98 = scmp.ne.s32.totalorder %s87, %s90
    %p99 = scmp.eq.s32.totalorder %s14, 1
    %p100 = por %p98, %p99
    %p101 = scmp.ne.s32.totalorder %s90, %s91
    %p102 = scmp.eq.s32.totalorder %s14, 0
    %p103 = por %p101, %p102
    %p104 = scmp.ne.s32.totalorder %s90, %s91
    %p105 = scmp.eq.s32.totalorder %s15, 1
    %p106 = por %p104, %p105
    %p108 = scmp.ne.s32.totalorder %s91, %s107
    %p109 = scmp.eq.s32.totalorder %s15, 0
    %p110 = por %p108, %p109
    %p111 = scmp.le.s32.totalorder 1, %s9
    %p112 = scmp.lt.s32.totalorder %s9, 3
    %p113 = pnand %p111, %p112
    %p114 = pneg %p113
    // Predicated region
    $region9: #{tpu_custom_call.1} parent=5 // pred_check
      _
    $region10: #{tpu_custom_call.1} parent=5 // pred_check_branch
      %116 = sbr.rel (%p113) target = $region12
    $region11: #{tpu_custom_call.1} parent=5 // pred_region
      %s117 = ssub.s32 %s9, 1
      // Predicated region
      $region13: #{tpu_custom_call.1} parent=11 // pred_check
        %p118 = pneg %p56
      $region14: #{tpu_custom_call.1} parent=11 // pred_check_branch
        %120 = sbr.rel (%p118) target = $region16
      $region15: #{tpu_custom_call.1} parent=11 // pred_region
        _
      $region16: #{tpu_custom_call.1} parent=11 // pred_fallthru
        _
      // Predicated region
      $region17: #{tpu_custom_call.1} parent=11 // pred_check
        %p121 = pneg %p77
      $region18: #{tpu_custom_call.1} parent=11 // pred_check_branch
        %123 = sbr.rel (%p121) target = $region20
      $region19: #{tpu_custom_call.1} parent=11 // pred_region
        _
      $region20: #{tpu_custom_call.1} parent=11 // pred_fallthru
        _
    $region12: #{tpu_custom_call.1} parent=5 // pred_fallthru
      _
    %p124 = scmp.lt.s32.totalorder %s9, 2
    // Predicated region
    $region21: #{tpu_custom_call.1} parent=5 // pred_check
      %p125 = pneg %p124
    $region22: #{tpu_custom_call.1} parent=5 // pred_check_branch
      %127 = sbr.rel (%p125) target = $region24
    $region23: #{tpu_custom_call.1} parent=5 // pred_region
      // Predicated region
      $region25: #{tpu_custom_call.1} parent=23 // pred_check
        %p128 = pneg %p29
      $region26: #{tpu_custom_call.1} parent=23 // pred_check_branch
        %130 = sbr.rel (%p128) target = $region28
      $region27: #{tpu_custom_call.1} parent=23 // pred_region
        %s131 = smul.u32 16, %s9
        %p132 = scmp.lt.s32.totalorder %s131, 31
        %s133 = scalar_select %p132, %s131, 31
        %s134 = smul.addr %s133, 4
        %s135 = scalar_lea.vmem %s0, %s134
        %s136 = smul.u32 16, %s9
      $region28: #{tpu_custom_call.1} parent=23 // pred_fallthru
        _
    $region24: #{tpu_custom_call.1} parent=5 // pred_fallthru
      _
    %p137 = scmp.le.s32.totalorder 1, %s9
    %p138 = scmp.lt.s32.totalorder %s9, 3
    %p139 = pnand %p137, %p138
    %p140 = pneg %p139
    // Predicated region
    $region29: #{tpu_custom_call.1} parent=5 // pred_check
      _
    $region30: #{tpu_custom_call.1} parent=5 // pred_check_branch
      %142 = sbr.rel (%p139) target = $region32
    $region31: #{tpu_custom_call.1} parent=5 // pred_region
      %s143 = ssub.s32 %s9, 1
      %s144 = smul.u32 16, %s14
      %p145 = scmp.lt.s32.totalorder %s144, 31
      %s146 = scalar_select %p145, %s144, 31
      %s147 = smul.addr %s146, 4
      %s148 = scalar_lea.vmem %s0, %s147
      %p149 = pneg %p35
      %p150 = pneg %p32
      %p151 = pneg %p56
      %p152 = pneg %p53
      %p153 = pneg %p77
      %p154 = pneg %p74
      %p155 = pneg %p103
      %p156 = pneg %p100
      %s157 = smul.u32 16, %s14
      %p158 = scmp.lt.s32.totalorder %s157, 31
      %s159 = scalar_select %p158, %s157, 31
      %s160 = smul.addr %s159, 8
      %s161 = scalar_lea.vmem %s3, %s160
      %s162 = smul.u32 16, %s14
      %p163 = scmp.lt.s32.totalorder %s162, 31
      %s164 = scalar_select %p163, %s162, 31
      %s165 = smul.addr %s164, 4
      %s166 = scalar_lea.vmem %s0, %s165
      %s167 = smul.u32 16, %s14
      %s168 = smul.u32 16, %s14
      %p169 = scmp.lt.s32.totalorder %s168, 31
      %s170 = scalar_select %p169, %s168, 31
      %s171 = smul.addr %s170, 8
      %s172 = scalar_lea.vmem %s3, %s171
      %s173 = smul.u32 16, %s14
      %v175 = vld [vmem:[%s166] sm:$0xf]
      %v176 = vld [vmem:[%s166 + $0x4] sm:$0xf]
      %v177 = vld [vmem:[%s166 + $0x8] sm:$0xf]
      %v178 = vld [vmem:[%s166 + $0xc] sm:$0xf]
      %v179 = vld [vmem:[%s166 + $0x10] sm:$0xf]
      %v180 = vld [vmem:[%s166 + $0x14] sm:$0xf]
      %v181 = vld [vmem:[%s166 + $0x18] sm:$0xf]
      %v182 = vld [vmem:[%s166 + $0x1c] sm:$0xf]
      %v183 = vld [vmem:[%s166 + $0x20] sm:$0xf]
      %v184 = vld [vmem:[%s166 + $0x24] sm:$0xf]
      %v185 = vld [vmem:[%s166 + $0x28] sm:$0xf]
      %v186 = vld [vmem:[%s166 + $0x2c] sm:$0xf]
      %v187 = vld [vmem:[%s166 + $0x30] sm:$0xf]
      %v188 = vld [vmem:[%s166 + $0x34] sm:$0xf]
      %v189 = vld [vmem:[%s166 + $0x38] sm:$0xf]
      %v190 = vld [vmem:[%s166 + $0x3c] sm:$0xf]
      %v191 = vld [vmem:[%s1] sm:$0xf]
      %v192 = vld [vmem:[%s1 + $0x4] sm:$0xf]
      %v193 = vld [vmem:[%s1 + $0x8] sm:$0xf]
      %v194 = vld [vmem:[%s1 + $0xc] sm:$0xf]
      %v195 = vld [vmem:[%s2] sm:$0x1]
      %v197 = vlaneseq
      %v198 = vshrl.u32 %v197, 7
      %v199 = vsub.s32 0, %v198
      %v200 = vrot.slane %v195, %v199
      %v218 = vunpack.c.l.b16 %v175
      %v219 = vunpack.c.l.b16 %v176
      %v220 = vunpack.c.l.b16 %v177
      %v221 = vunpack.c.l.b16 %v178
      %v222 = vunpack.c.l.b16 %v179
      %v223 = vunpack.c.l.b16 %v180
      %v224 = vunpack.c.l.b16 %v181
      %v225 = vunpack.c.l.b16 %v182
      %v226 = vunpack.c.l.b16 %v183
      %v227 = vunpack.c.l.b16 %v184
      %v228 = vunpack.c.l.b16 %v185
      %v229 = vunpack.c.l.b16 %v186
      %v230 = vunpack.c.l.b16 %v187
      %v231 = vunpack.c.l.b16 %v188
      %v232 = vunpack.c.l.b16 %v189
      %v233 = vunpack.c.l.b16 %v190
      %v234 = vpack.c.b16 %v219, %v218
      %v235 = vpack.c.b16 %v221, %v220
      %v236 = vpack.c.b16 %v223, %v222
      %v237 = vpack.c.b16 %v225, %v224
      %v238 = vpack.c.b16 %v227, %v226
      %v239 = vpack.c.b16 %v229, %v228
      %v240 = vpack.c.b16 %v231, %v230
      %v241 = vpack.c.b16 %v233, %v232
      %v246 = vunpack.c.l.b16 %v191
      %v247 = vunpack.c.l.b16 %v192
      %v248 = vunpack.c.l.b16 %v193
      %v249 = vunpack.c.l.b16 %v194
      %v250 = vpack.c.b16 %v247, %v246
      %v251 = vpack.c.b16 %v249, %v248
      %vm254 = vcmask 261120
      %v256 = vsel %vm254, %v234, 0
      %v259 = vsel %vm254, %v235, 0
      %v262 = vsel %vm254, %v236, 0
      %v265 = vsel %vm254, %v237, 0
      %v268 = vsel %vm254, %v238, 0
      %v271 = vsel %vm254, %v239, 0
      %v274 = vsel %vm254, %v240, 0
      %v277 = vsel %vm254, %v241, 0
      %279 = vmatprep.subr.bf16.mxu0 0
      %280 = vmatpush1.bf16.msra.mxu0 %v250
      %281 = vmatprep.subr.bf16.mxu0 0
      %282 = vmatpush1.bf16.msra.mxu0 %v251
      %283 = vmatprep.subr.bf16.mxu0 0
      %284 = vmatpush1.bf16.msra.mxu0 0
      %285 = vmatprep.subr.bf16.mxu0 0
      %286 = vmatpush1.bf16.msra.mxu0 0
      %287 = vmatprep.subr.bf16.mxu0 0
      %288 = vmatpush1.bf16.msra.mxu0 0
      %289 = vmatprep.subr.bf16.mxu0 0
      %290 = vmatpush1.bf16.msra.mxu0 0
      %291 = vmatprep.subr.bf16.mxu0 0
      %292 = vmatpush1.bf16.msra.mxu0 0
      %293 = vmatprep.subr.bf16.mxu0 0
      %294 = vmatpush1.bf16.msra.mxu0 0
      %295 = vmatprep.subr.bf16.mxu0 0
      %296 = vmatpush1.bf16.msra.mxu0 0
      %297 = vmatprep.subr.bf16.mxu0 0
      %298 = vmatpush1.bf16.msra.mxu0 0
      %299 = vmatprep.subr.bf16.mxu0 0
      %300 = vmatpush1.bf16.msra.mxu0 0
      %301 = vmatprep.subr.bf16.mxu0 0
      %302 = vmatpush1.bf16.msra.mxu0 0
      %303 = vmatprep.subr.bf16.mxu0 0
      %304 = vmatpush1.bf16.msra.mxu0 0
      %305 = vmatprep.subr.bf16.mxu0 0
      %306 = vmatpush1.bf16.msra.mxu0 0
      %307 = vmatprep.subr.bf16.mxu0 0
      %308 = vmatpush1.bf16.msra.mxu0 0
      %309 = vmatprep.subr.bf16.mxu0 0
      %310 = vmatpush1.bf16.msra.mxu0 0
      %311 = vmatprep.mubr.bf16.mxu0 0
      %312 = vmatmul.mubr.bf16.gmra.mrb[0].mxu0 %v256
      %v313 = vpop.f32.mrb[0].mxu0
      %v314 = vadd.f32 %v200, %v313
      %v315 = vpop.f32.mrb[0].mxu0
      %v316 = vpop.f32.mrb[0].mxu0
      %v317 = vadd.f32 %v200, %v316
      %v318 = vpop.f32.mrb[0].mxu0
      %319 = vmatprep.mubr.bf16.mxu0 0
      %320 = vmatmul.mubr.bf16.gmra.mrb[0].mxu0 %v259
      %v321 = vpop.f32.mrb[0].mxu0
      %v322 = vadd.f32 %v200, %v321
      %v323 = vpop.f32.mrb[0].mxu0
      %v324 = vpop.f32.mrb[0].mxu0
      %v325 = vadd.f32 %v200, %v324
      %v326 = vpop.f32.mrb[0].mxu0
      %327 = vmatprep.mubr.bf16.mxu0 0
      %328 = vmatmul.mubr.bf16.gmra.mrb[0].mxu0 %v262
      %v329 = vpop.f32.mrb[0].mxu0
      %v330 = vadd.f32 %v200, %v329
      %v331 = vpop.f32.mrb[0].mxu0
      %v332 = vpop.f32.mrb[0].mxu0
      %v333 = vadd.f32 %v200, %v332
      %v334 = vpop.f32.mrb[0].mxu0
      %335 = vmatprep.mubr.bf16.mxu0 0
      %336 = vmatmul.mubr.bf16.gmra.mrb[0].mxu0 %v265
      %v337 = vpop.f32.mrb[0].mxu0
      %v338 = vadd.f32 %v200, %v337
      %v339 = vpop.f32.mrb[0].mxu0
      %v340 = vpop.f32.mrb[0].mxu0
      %v341 = vadd.f32 %v200, %v340
      %v342 = vpop.f32.mrb[0].mxu0
      %343 = vmatprep.mubr.bf16.mxu0 0
      %344 = vmatmul.mubr.bf16.gmra.mrb[0].mxu0 %v268
      %v345 = vpop.f32.mrb[0].mxu0
      %v346 = vadd.f32 %v200, %v345
      %v347 = vpop.f32.mrb[0].mxu0
      %v348 = vpop.f32.mrb[0].mxu0
      %v349 = vadd.f32 %v200, %v348
      %v350 = vpop.f32.mrb[0].mxu0
      %351 = vmatprep.mubr.bf16.mxu0 0
      %352 = vmatmul.mubr.bf16.gmra.mrb[0].mxu0 %v271
      %v353 = vpop.f32.mrb[0].mxu0
      %v354 = vadd.f32 %v200, %v353
      %v355 = vpop.f32.mrb[0].mxu0
      %v356 = vpop.f32.mrb[0].mxu0
      %v357 = vadd.f32 %v200, %v356
      %v358 = vpop.f32.mrb[0].mxu0
      %359 = vmatprep.mubr.bf16.mxu0 0
      %360 = vmatmul.mubr.bf16.gmra.mrb[0].mxu0 %v274
      %v361 = vpop.f32.mrb[0].mxu0
      %v362 = vadd.f32 %v200, %v361
      %v363 = vpop.f32.mrb[0].mxu0
      %v364 = vpop.f32.mrb[0].mxu0
      %v365 = vadd.f32 %v200, %v364
      %v366 = vpop.f32.mrb[0].mxu0
      %367 = vmatprep.mubr.bf16.mxu0 0
      %368 = vmatmul.mubr.bf16.gmra.mrb[0].mxu0 %v277
      %v369 = vpop.f32.mrb[0].mxu0
      %v370 = vadd.f32 %v200, %v369
      %v371 = vpop.f32.mrb[0].mxu0
      %v372 = vpop.f32.mrb[0].mxu0
      %v373 = vadd.f32 %v200, %v372
      %v374 = vpop.f32.mrb[0].mxu0
      %375 = vdwg.mxu0
      %vm376 = vcmask 64512
      %377 = vst.msk [vmem:[%s172] sm:$0xff] %vm376, %v314
      %378 = vst.msk [vmem:[%s172 + $0x8] sm:$0xff] %vm376, %v317
      %379 = vst.msk [vmem:[%s172 + $0x10] sm:$0xff] %vm376, %v322
      %380 = vst.msk [vmem:[%s172 + $0x18] sm:$0xff] %vm376, %v325
      %381 = vst.msk [vmem:[%s172 + $0x20] sm:$0xff] %vm376, %v330
      %382 = vst.msk [vmem:[%s172 + $0x28] sm:$0xff] %vm376, %v333
      %383 = vst.msk [vmem:[%s172 + $0x30] sm:$0xff] %vm376, %v338
      %384 = vst.msk [vmem:[%s172 + $0x38] sm:$0xff] %vm376, %v341
      %385 = vst.msk [vmem:[%s172 + $0x40] sm:$0xff] %vm376, %v346
      %386 = vst.msk [vmem:[%s172 + $0x48] sm:$0xff] %vm376, %v349
      %387 = vst.msk [vmem:[%s172 + $0x50] sm:$0xff] %vm376, %v354
      %388 = vst.msk [vmem:[%s172 + $0x58] sm:$0xff] %vm376, %v357
      %389 = vst.msk [vmem:[%s172 + $0x60] sm:$0xff] %vm376, %v362
      %390 = vst.msk [vmem:[%s172 + $0x68] sm:$0xff] %vm376, %v365
      %391 = vst.msk [vmem:[%s172 + $0x70] sm:$0xff] %vm376, %v370
      %392 = vst.msk [vmem:[%s172 + $0x78] sm:$0xff] %vm376, %v373
      %s393 = smul.u32 16, %s14
      %p394 = scmp.lt.s32.totalorder %s393, 31
      %s395 = scalar_select %p394, %s393, 31
      %s396 = smul.addr %s395, 8
      %s397 = scalar_lea.vmem %s3, %s396
      // Predicated region
      $region33: #{tpu_custom_call.1} parent=31 // pred_check
        %p398 = pneg %p100
      $region34: #{tpu_custom_call.1} parent=31 // pred_check_branch
        %400 = sbr.rel (%p398) target = $region36
      $region35: #{tpu_custom_call.1} parent=31 // pred_region
        %s401 = smul.u32 16, %s14
      $region36: #{tpu_custom_call.1} parent=31 // pred_fallthru
        _
    $region32: #{tpu_custom_call.1} parent=5 // pred_fallthru
      _
    %p402 = scmp.le.s32.totalorder 2, %s9
    // Predicated region
    $region37: #{tpu_custom_call.1} parent=5 // pred_check
      %p403 = pneg %p402
    $region38: #{tpu_custom_call.1} parent=5 // pred_check_branch
      %405 = sbr.rel (%p403) target = $region40
    $region39: #{tpu_custom_call.1} parent=5 // pred_region
      %s406 = ssub.s32 %s9, 2
      // Predicated region
      $region41: #{tpu_custom_call.1} parent=39 // pred_check
        %p407 = pneg %p106
      $region42: #{tpu_custom_call.1} parent=39 // pred_check_branch
        %409 = sbr.rel (%p407) target = $region44
      $region43: #{tpu_custom_call.1} parent=39 // pred_region
        %s410 = smul.u32 16, %s15
        %p411 = scmp.lt.s32.totalorder %s410, 31
        %s412 = scalar_select %p411, %s410, 31
        %s413 = smul.addr %s412, 8
        %s414 = scalar_lea.vmem %s3, %s413
      $region44: #{tpu_custom_call.1} parent=39 // pred_fallthru
        _
    $region40: #{tpu_custom_call.1} parent=5 // pred_fallthru
      _
  $region6: #{tpu_custom_call.1} parent=0 // loop_footer
    %s13 = sadd.s32 1, %s9
  $region7: #{tpu_custom_call.1} parent=0 // loop_footer_branch
    %8 = sbr.rel target = $region3
  $region8: #{tpu_custom_call.1} parent=0 // loop_exit
    _

</llo_original>
